<compile_context>
chip_gen: v7x
topology: tpu7x:2x2x1
jax: 0.10.0
libtpu: 0.0.40
codegen_flags: <defaults>
</compile_context>

<pallas_src>
import jax
import jax.numpy as jnp
from jax.experimental import pallas as pl
from jax.experimental.pallas import tpu as pltpu


# ---------------------------------------------------------------------------
# Kernels
# ---------------------------------------------------------------------------
def _ensemble_mean_single_kernel(x_ref, w_ref, b_ref, o_ref):
    """Gridless single-shot forward.

    x_ref : (B, D)    bf16  -- flattened input batch
    w_ref : (D, NCp)  bf16  -- ensemble-mean weights, class dim padded to 128k
    b_ref : (1, NCp)  f32   -- ensemble-mean bias (padded)
    o_ref : (B, NCp)  f32   -- mean logits (padded)
    """
    o_ref[...] = (
        jnp.dot(x_ref[...], w_ref[...], preferred_element_type=jnp.float32)
        + b_ref[...]
    ).astype(o_ref.dtype)


def _ensemble_mean_tiled_kernel(x_ref, w_ref, b_ref, o_ref, acc_ref):
    """Tiled forward.  grid = (B tiles ["parallel"], D chunks ["arbitrary"]).

    x_ref : (tb, td)   bf16
    w_ref : (td, NCp)  bf16
    b_ref : (1, NCp)   f32
    o_ref : (tb, NCp)  f32   -- same output block across the D axis
    acc   : (tb, NCp)  f32 scratch accumulator
    """
    k = pl.program_id(1)

    @pl.when(k == 0)
    def _():
        acc_ref[...] = jnp.zeros_like(acc_ref)

    acc_ref[...] += jnp.dot(
        x_ref[...], w_ref[...], preferred_element_type=jnp.float32
    )

    @pl.when(k == pl.num_programs(1) - 1)
    def _():
        o_ref[...] = (acc_ref[...] + b_ref[...]).astype(o_ref.dtype)


# ---------------------------------------------------------------------------
# Wrapper
# ---------------------------------------------------------------------------
# Stay safely under the default scoped-VMEM limit on every generation
# (16 MiB on v5e, 32 MiB on v6e/v7x).
_GRIDLESS_VMEM_BYTES = 12 * 1024 * 1024


def ensemble_mean(x_nchw, weights, biases, *, block_b=None, block_d=None):
    """Ensemble forward pass, mode='mean', for stacked affine members.

    x_nchw : [B, C, H, W]
    weights: [M, D, NUM_CLASSES]  (D = C*H*W)
    biases : [M, NUM_CLASSES]
    returns: [B, NUM_CLASSES] f32 == mean_m( x_flat @ W_m + b_m )

    block_b / block_d force the tiled path with those tile sizes.
    """
    B = x_nchw.shape[0]
    M, D, NC = weights.shape
    del M  # the model axis is reduced away below

    # --- Hoist the ensemble mean out of the kernel (mean-of-affine ==
    #     affine-of-mean).  Average in f32, cast only the mean to bf16.
    w_mean = jnp.mean(weights.astype(jnp.float32), axis=0)       # (D, NC)
    b_mean = jnp.mean(biases.astype(jnp.float32), axis=0)        # (NC,)

    # --- Lane-dense layout: pad the class dim up to a multiple of 128 so the
    #     weight block and the output last dim use full vregs / unmasked vst.
    NCp = 128 * pl.cdiv(NC, 128)
    w_pad = jnp.pad(w_mean, ((0, 0), (0, NCp - NC))).astype(jnp.bfloat16)
    b_pad = jnp.pad(b_mean, (0, NCp - NC)).reshape(1, NCp)       # f32

    x_flat = x_nchw.reshape(B, D).astype(jnp.bfloat16)

    force_tiled = (block_b is not None) or (block_d is not None)
    resident_bytes = (
        (x_flat.size + w_pad.size) * 2          # bf16 inputs
        + (b_pad.size + B * NCp) * 4            # f32 bias + output
    )

    # ------------------------------------------------------------------
    # Gridless single-shot path: no grid -> no double buffering; whole
    # arrays live once in VMEM.
    # ------------------------------------------------------------------
    if not force_tiled and resident_bytes <= _GRIDLESS_VMEM_BYTES:
        vmem = pl.BlockSpec(memory_space=pltpu.MemorySpace.VMEM)
        out_p = pl.pallas_call(
            _ensemble_mean_single_kernel,
            out_shape=jax.ShapeDtypeStruct((B, NCp), jnp.float32),
            in_specs=[vmem, vmem, vmem],
            out_specs=vmem,
        )(x_flat, w_pad, b_pad)
        return out_p[:, :NC]

    # ------------------------------------------------------------------
    # Tiled path (large B and/or D, e.g. v7x's 64 MiB VMEM): B tiles are
    # "parallel" (feeds both v7x TensorCores), D chunks are the trailing
    # "arbitrary" reduction axis with an f32 accumulator scratch.
    # ------------------------------------------------------------------
    tb = block_b if block_b is not None else min(B, 256)
    td = block_d if block_d is not None else min(D, 512)
    if td != D and td % 128 != 0:
        td = 128 * pl.cdiv(td, 128)

    Bp = tb * pl.cdiv(B, tb)
    Dp = td * pl.cdiv(D, td)

    # Zero padding along D is exact (contributes nothing to the dot product);
    # padded B rows are sliced off below.
    x_p = x_flat
    if (Bp, Dp) != (B, D):
        x_p = jnp.pad(x_flat, ((0, Bp - B), (0, Dp - D)))
    w_p = w_pad
    if Dp != D:
        w_p = jnp.pad(w_pad, ((0, Dp - D), (0, 0)))

    grid = (Bp // tb, Dp // td)
    out_p = pl.pallas_call(
        _ensemble_mean_tiled_kernel,
        out_shape=jax.ShapeDtypeStruct((Bp, NCp), jnp.float32),
        grid_spec=pltpu.PrefetchScalarGridSpec(
            num_scalar_prefetch=0,
            grid=grid,
            in_specs=[
                pl.BlockSpec((tb, td), lambda i, k: (i, k)),
                pl.BlockSpec((td, NCp), lambda i, k: (k, 0)),
                pl.BlockSpec((1, NCp), lambda i, k: (0, 0)),
            ],
            out_specs=pl.BlockSpec((tb, NCp), lambda i, k: (i, 0)),
            scratch_shapes=[pltpu.VMEM((tb, NCp), jnp.float32)],
        ),
        compiler_params=pltpu.CompilerParams(
            dimension_semantics=("parallel", "arbitrary"),
        ),
    )(x_p, w_p, b_pad)
    return out_p[:B, :NC]


# ---------------------------------------------------------------------------
# Demo / correctness check
# ---------------------------------------------------------------------------
if __name__ == "__main__":
    # Small shapes consistent with the module's image-classifier use case.
    B, C, H, W = 2, 4, 16, 16
    NUM_CLASSES = 8
    NUM_MODELS = 3
    D = C * H * W

    key = jax.random.PRNGKey(0)
    kx, kw, kb = jax.random.split(key, 3)

    x = jax.random.normal(kx, (B, C, H, W), dtype=jnp.float32)
    weights = (
        jax.random.normal(kw, (NUM_MODELS, D, NUM_CLASSES), dtype=jnp.float32) * 0.02
    )
    biases = jax.random.normal(kb, (NUM_MODELS, NUM_CLASSES), dtype=jnp.float32) * 0.1

    # Pure-JAX reference (PyTorch semantics, f32): stack per-member logits,
    # mean over the model axis.
    x_flat = x.reshape(B, D)
    ref = jnp.mean(
        jnp.stack([x_flat @ weights[m] + biases[m] for m in range(NUM_MODELS)]),
        axis=0,
    )

    # Gridless single-shot path (the one these shapes actually use).
    out = jax.block_until_ready(ensemble_mean(x, weights, biases))
    assert out.shape == (B, NUM_CLASSES)
    # bf16 x / mean-weight streaming -> loose-ish tolerance vs f32 reference.
    assert jnp.allclose(out, ref, atol=2e-2, rtol=2e-2), "gridless path mismatch"

    # Force the tiled (B-parallel, D-reduction) path to exercise it too.
    out_tiled = jax.block_until_ready(ensemble_mean(x, weights, biases, block_d=256))
    assert out_tiled.shape == (B, NUM_CLASSES)
    assert jnp.allclose(out_tiled, ref, atol=2e-2, rtol=2e-2), "tiled path mismatch"

    print("KERNEL_OK")
</pallas_src>

<mosaic_0001>
module attributes {stable_mosaic.version = 11 : i64} {
  func.func @_ensemble_mean_single_kernel(%arg0: memref<2x1024xbf16, #tpu.memory_space<vmem>>, %arg1: memref<1024x128xbf16, #tpu.memory_space<vmem>>, %arg2: memref<1x128xf32, #tpu.memory_space<vmem>>, %arg3: memref<2x128xf32, #tpu.memory_space<vmem>>) attributes {dimension_semantics = [], scalar_prefetch = 0 : i64, scratch_operands = 0 : i64, tpu.core_type = #tpu.core_type<tc>} {
    %c0 = arith.constant 0 : index
    %c0_0 = arith.constant 0 : index
    %0 = vector.load %arg0[%c0, %c0_0] : memref<2x1024xbf16, #tpu.memory_space<vmem>>, vector<2x1024xbf16>
    %c0_1 = arith.constant 0 : index
    %c0_2 = arith.constant 0 : index
    %1 = vector.load %arg1[%c0_1, %c0_2] : memref<1024x128xbf16, #tpu.memory_space<vmem>>, vector<1024x128xbf16>
    %cst = arith.constant dense<0.000000e+00> : vector<2x128xf32>
    %2 = tpu.matmul %0, %1, %cst {dimension_numbers = #tpu.dot_dimension_numbers<[1], [0], [0], [1], [0, 0, 1, 1], [], []>} : vector<2x1024xbf16>, vector<1024x128xbf16>, vector<2x128xf32> -> vector<2x128xf32>
    %c0_3 = arith.constant 0 : index
    %c0_4 = arith.constant 0 : index
    %3 = vector.load %arg2[%c0_3, %c0_4] : memref<1x128xf32, #tpu.memory_space<vmem>>, vector<1x128xf32>
    %4 = vector.broadcast %3 : vector<1x128xf32> to vector<2x128xf32>
    %5 = arith.addf %2, %4 : vector<2x128xf32>
    %c0_5 = arith.constant 0 : index
    %c0_6 = arith.constant 0 : index
    %6 = vector.load %arg3[%c0_5, %c0_6] : memref<2x128xf32, #tpu.memory_space<vmem>>, vector<2x128xf32>
    tpu.vector_store %arg3[%c0_5, %c0_6], %5 {strides = array<i32>} : memref<2x128xf32, #tpu.memory_space<vmem>>, vector<2x128xf32>,
    return
  }
}

</mosaic_0001>

<llo_original>
// kernel: tpu_custom_call.1
$region0: #{tpu_custom_call.1}
  #allocation0 [shape = 'u32[]', space=smem, size = 0x4, offset = 0x4, fixed_abs, tag = 'smem constant byte address 0x4 - core index']
  #allocation1 [shape = 'u32[144,128]{1,0:T(1,128)}', space=vmem, size = 0x12000, scoped, tag = 'internal scratch']
  %s0 = inlined_call_operand.hbm [shape: bf16[2,1024], index: 0, kind: input, shape index: {}]
  %s1 = inlined_call_operand.hbm [shape: bf16[1024,128], index: 1, kind: input, shape index: {}]
  %s2 = inlined_call_operand.vmem [shape: f32[1,128], index: 2, kind: input, shape index: {}]
  %s3 = inlined_call_operand.hbm [shape: f32[2,128], index: 3, kind: output, shape index: {}]
  %s4 = sld [smem:[#allocation0]]
  $region30: #{tpu_custom_call.1} parent=0
    _
  %s6 = ssub.s32 1, %s4
  %s7 = scalar_select 0, %s6, %s4
  $region1: #{tpu_custom_call.1} parent=0
    #allocation2 [shape = 'u8[4096]{0}', space=vmem, size = 0x1000, scoped, tag = 'input window, operand 0, single buffered']
    #allocation3 [shape = 's32[1]{0}', space=sflag, size = 0x4, scoped, tag = 'scoped memory for tpu_custom_call.1']
    #allocation4 [shape = 's32[1]{0}', space=sflag, size = 0x4, scoped, tag = 'scoped memory for tpu_custom_call.1']
    #allocation5 [shape = 'u8[262144]{0}', space=vmem, size = 0x40000, scoped, tag = 'input window, operand 1, single buffered']
    #allocation6 [shape = 's32[1]{0}', space=sflag, size = 0x4, scoped, tag = 'scoped memory for tpu_custom_call.1']
    #allocation7 [shape = 'u8[1024]{0}', space=vmem, size = 0x400, scoped, tag = 'output window, operand 0, single buffered']
    %8 = vsyncpa [#allocation3], 0
    %9 = vsyncpa [#allocation6], 0
    %10 = vsyncpa [#allocation4], 0
    // Predicated region
    $region2: #{tpu_custom_call.1} parent=1 // pred_check
      _
    $region3: #{tpu_custom_call.1} parent=1 // pred_check_branch
      %12 = sbr.rel (0) target = $region5
    $region4: #{tpu_custom_call.1} parent=1 // pred_region
      %s14 = ssub.s32 128, 128
      %15 = vsyncadd [#allocation3], %s14
      %s17 = sshll.u32 [#allocation2], 4
      %s18 = int_to_ptr.vmem [resolvable:$true] %s17
      %20 = dma.hbm_to_vmem [thread:$0]  %s0, 128, %s18, [#allocation3]
    $region5: #{tpu_custom_call.1} parent=1 // pred_fallthru
      _
    // Predicated region
    $region6: #{tpu_custom_call.1} parent=1 // pred_check
      _
    $region7: #{tpu_custom_call.1} parent=1 // pred_check_branch
      %22 = sbr.rel (0) target = $region9
    $region8: #{tpu_custom_call.1} parent=1 // pred_region
      %s24 = ssub.s32 8192, 8192
      %25 = vsyncadd [#allocation6], %s24
      %s26 = sshll.u32 [#allocation5], 4
      %s27 = int_to_ptr.vmem [resolvable:$true] %s26
      %32 = dma.hbm_to_vmem [thread:$0]  %s1, 8192, %s27, [#allocation6], 64, 64, 4
    $region9: #{tpu_custom_call.1} parent=1 // pred_fallthru
      _
    // Predicated region
    $region10: #{tpu_custom_call.1} parent=1 // pred_check
      _
    $region11: #{tpu_custom_call.1} parent=1 // pred_check_branch
      %34 = sbr.rel (0) target = $region13
    $region12: #{tpu_custom_call.1} parent=1 // pred_region
      _
    $region13: #{tpu_custom_call.1} parent=1 // pred_fallthru
      _
    // Predicated region
    $region14: #{tpu_custom_call.1} parent=1 // pred_check
      _
    $region15: #{tpu_custom_call.1} parent=1 // pred_check_branch
      %36 = sbr.rel (0) target = $region17
    $region16: #{tpu_custom_call.1} parent=1 // pred_region
      %37 = dma.done [#allocation3], 128
    $region17: #{tpu_custom_call.1} parent=1 // pred_fallthru
      _
    // Predicated region
    $region18: #{tpu_custom_call.1} parent=1 // pred_check
      _
    $region19: #{tpu_custom_call.1} parent=1 // pred_check_branch
      %39 = sbr.rel (0) target = $region21
    $region20: #{tpu_custom_call.1} parent=1 // pred_region
      %40 = dma.done [#allocation6], 8192
    $region21: #{tpu_custom_call.1} parent=1 // pred_fallthru
      _
    %v42 = vld [vmem:[#allocation2] sm:$0xff]
    %v43 = vld [vmem:[#allocation5] sm:$0xf]
    %v44 = vld [vmem:[#allocation5 + $0x4] sm:$0xf]
    %v45 = vld [vmem:[#allocation5 + $0x8] sm:$0xf]
    %v46 = vld [vmem:[#allocation5 + $0xc] sm:$0xf]
    %v47 = vld [vmem:[#allocation5 + $0x10] sm:$0xf]
    %v48 = vld [vmem:[#allocation5 + $0x14] sm:$0xf]
    %v49 = vld [vmem:[#allocation5 + $0x18] sm:$0xf]
    %v50 = vld [vmem:[#allocation5 + $0x1c] sm:$0xf]
    %v51 = vld [vmem:[#allocation5 + $0x20] sm:$0xf]
    %v52 = vld [vmem:[#allocation5 + $0x24] sm:$0xf]
    %v53 = vld [vmem:[#allocation5 + $0x28] sm:$0xf]
    %v54 = vld [vmem:[#allocation5 + $0x2c] sm:$0xf]
    %v55 = vld [vmem:[#allocation5 + $0x30] sm:$0xf]
    %v56 = vld [vmem:[#allocation5 + $0x34] sm:$0xf]
    %v57 = vld [vmem:[#allocation5 + $0x38] sm:$0xf]
    %v58 = vld [vmem:[#allocation5 + $0x3c] sm:$0xf]
    %v59 = vld [vmem:[#allocation5 + $0x40] sm:$0xf]
    %v60 = vld [vmem:[#allocation5 + $0x44] sm:$0xf]
    %v61 = vld [vmem:[#allocation5 + $0x48] sm:$0xf]
    %v62 = vld [vmem:[#allocation5 + $0x4c] sm:$0xf]
    %v63 = vld [vmem:[#allocation5 + $0x50] sm:$0xf]
    %v64 = vld [vmem:[#allocation5 + $0x54] sm:$0xf]
    %v65 = vld [vmem:[#allocation5 + $0x58] sm:$0xf]
    %v66 = vld [vmem:[#allocation5 + $0x5c] sm:$0xf]
    %v67 = vld [vmem:[#allocation5 + $0x60] sm:$0xf]
    %v68 = vld [vmem:[#allocation5 + $0x64] sm:$0xf]
    %v69 = vld [vmem:[#allocation5 + $0x68] sm:$0xf]
    %v70 = vld [vmem:[#allocation5 + $0x6c] sm:$0xf]
    %v71 = vld [vmem:[#allocation5 + $0x70] sm:$0xf]
    %v72 = vld [vmem:[#allocation5 + $0x74] sm:$0xf]
    %v73 = vld [vmem:[#allocation5 + $0x78] sm:$0xf]
    %v74 = vld [vmem:[#allocation5 + $0x7c] sm:$0xf]
    %v75 = vld [vmem:[#allocation5 + $0x80] sm:$0xf]
    %v76 = vld [vmem:[#allocation5 + $0x84] sm:$0xf]
    %v77 = vld [vmem:[#allocation5 + $0x88] sm:$0xf]
    %v78 = vld [vmem:[#allocation5 + $0x8c] sm:$0xf]
    %v79 = vld [vmem:[#allocation5 + $0x90] sm:$0xf]
    %v80 = vld [vmem:[#allocation5 + $0x94] sm:$0xf]
    %v81 = vld [vmem:[#allocation5 + $0x98] sm:$0xf]
    %v82 = vld [vmem:[#allocation5 + $0x9c] sm:$0xf]
    %v83 = vld [vmem:[#allocation5 + $0xa0] sm:$0xf]
    %v84 = vld [vmem:[#allocation5 + $0xa4] sm:$0xf]
    %v85 = vld [vmem:[#allocation5 + $0xa8] sm:$0xf]
    %v86 = vld [vmem:[#allocation5 + $0xac] sm:$0xf]
    %v87 = vld [vmem:[#allocation5 + $0xb0] sm:$0xf]
    %v88 = vld [vmem:[#allocation5 + $0xb4] sm:$0xf]
    %v89 = vld [vmem:[#allocation5 + $0xb8] sm:$0xf]
    %v90 = vld [vmem:[#allocation5 + $0xbc] sm:$0xf]
    %v91 = vld [vmem:[#allocation5 + $0xc0] sm:$0xf]
    %v92 = vld [vmem:[#allocation5 + $0xc4] sm:$0xf]
    %v93 = vld [vmem:[#allocation5 + $0xc8] sm:$0xf]
    %v94 = vld [vmem:[#allocation5 + $0xcc] sm:$0xf]
    %v95 = vld [vmem:[#allocation5 + $0xd0] sm:$0xf]
    %v96 = vld [vmem:[#allocation5 + $0xd4] sm:$0xf]
    %v97 = vld [vmem:[#allocation5 + $0xd8] sm:$0xf]
    %v98 = vld [vmem:[#allocation5 + $0xdc] sm:$0xf]
    %v99 = vld [vmem:[#allocation5 + $0xe0] sm:$0xf]
    %v100 = vld [vmem:[#allocation5 + $0xe4] sm:$0xf]
    %v101 = vld [vmem:[#allocation5 + $0xe8] sm:$0xf]
    %v102 = vld [vmem:[#allocation5 + $0xec] sm:$0xf]
    %v103 = vld [vmem:[#allocation5 + $0xf0] sm:$0xf]
    %v104 = vld [vmem:[#allocation5 + $0xf4] sm:$0xf]
    %v105 = vld [vmem:[#allocation5 + $0xf8] sm:$0xf]
    %v106 = vld [vmem:[#allocation5 + $0xfc] sm:$0xf]
    %v107 = vld [vmem:[#allocation5 + $0x100] sm:$0xf]
    %v108 = vld [vmem:[#allocation5 + $0x104] sm:$0xf]
    %v109 = vld [vmem:[#allocation5 + $0x108] sm:$0xf]
    %v110 = vld [vmem:[#allocation5 + $0x10c] sm:$0xf]
    %v111 = vld [vmem:[#allocation5 + $0x110] sm:$0xf]
    %v112 = vld [vmem:[#allocation5 + $0x114] sm:$0xf]
    %v113 = vld [vmem:[#allocation5 + $0x118] sm:$0xf]
    %v114 = vld [vmem:[#allocation5 + $0x11c] sm:$0xf]
    %v115 = vld [vmem:[#allocation5 + $0x120] sm:$0xf]
    %v116 = vld [vmem:[#allocation5 + $0x124] sm:$0xf]
    %v117 = vld [vmem:[#allocation5 + $0x128] sm:$0xf]
    %v118 = vld [vmem:[#allocation5 + $0x12c] sm:$0xf]
    %v119 = vld [vmem:[#allocation5 + $0x130] sm:$0xf]
    %v120 = vld [vmem:[#allocation5 + $0x134] sm:$0xf]
    %v121 = vld [vmem:[#allocation5 + $0x138] sm:$0xf]
    %v122 = vld [vmem:[#allocation5 + $0x13c] sm:$0xf]
    %v123 = vld [vmem:[#allocation5 + $0x140] sm:$0xf]
    %v124 = vld [vmem:[#allocation5 + $0x144] sm:$0xf]
    %v125 = vld [vmem:[#allocation5 + $0x148] sm:$0xf]
    %v126 = vld [vmem:[#allocation5 + $0x14c] sm:$0xf]
    %v127 = vld [vmem:[#allocation5 + $0x150] sm:$0xf]
    %v128 = vld [vmem:[#allocation5 + $0x154] sm:$0xf]
    %v129 = vld [vmem:[#allocation5 + $0x158] sm:$0xf]
    %v130 = vld [vmem:[#allocation5 + $0x15c] sm:$0xf]
    %v131 = vld [vmem:[#allocation5 + $0x160] sm:$0xf]
    %v132 = vld [vmem:[#allocation5 + $0x164] sm:$0xf]
    %v133 = vld [vmem:[#allocation5 + $0x168] sm:$0xf]
    %v134 = vld [vmem:[#allocation5 + $0x16c] sm:$0xf]
    %v135 = vld [vmem:[#allocation5 + $0x170] sm:$0xf]
    %v136 = vld [vmem:[#allocation5 + $0x174] sm:$0xf]
    %v137 = vld [vmem:[#allocation5 + $0x178] sm:$0xf]
    %v138 = vld [vmem:[#allocation5 + $0x17c] sm:$0xf]
    %v139 = vld [vmem:[#allocation5 + $0x180] sm:$0xf]
    %v140 = vld [vmem:[#allocation5 + $0x184] sm:$0xf]
    %v141 = vld [vmem:[#allocation5 + $0x188] sm:$0xf]
    %v142 = vld [vmem:[#allocation5 + $0x18c] sm:$0xf]
    %v143 = vld [vmem:[#allocation5 + $0x190] sm:$0xf]
    %v144 = vld [vmem:[#allocation5 + $0x194] sm:$0xf]
    %v145 = vld [vmem:[#allocation5 + $0x198] sm:$0xf]
    %v146 = vld [vmem:[#allocation5 + $0x19c] sm:$0xf]
    %v147 = vld [vmem:[#allocation5 + $0x1a0] sm:$0xf]
    %v148 = vld [vmem:[#allocation5 + $0x1a4] sm:$0xf]
    %v149 = vld [vmem:[#allocation5 + $0x1a8] sm:$0xf]
    %v150 = vld [vmem:[#allocation5 + $0x1ac] sm:$0xf]
    %v151 = vld [vmem:[#allocation5 + $0x1b0] sm:$0xf]
    %v152 = vld [vmem:[#allocation5 + $0x1b4] sm:$0xf]
    %v153 = vld [vmem:[#allocation5 + $0x1b8] sm:$0xf]
    %v154 = vld [vmem:[#allocation5 + $0x1bc] sm:$0xf]
    %v155 = vld [vmem:[#allocation5 + $0x1c0] sm:$0xf]
    %v156 = vld [vmem:[#allocation5 + $0x1c4] sm:$0xf]
    %v157 = vld [vmem:[#allocation5 + $0x1c8] sm:$0xf]
    %v158 = vld [vmem:[#allocation5 + $0x1cc] sm:$0xf]
    %v159 = vld [vmem:[#allocation5 + $0x1d0] sm:$0xf]
    %v160 = vld [vmem:[#allocation5 + $0x1d4] sm:$0xf]
    %v161 = vld [vmem:[#allocation5 + $0x1d8] sm:$0xf]
    %v162 = vld [vmem:[#allocation5 + $0x1dc] sm:$0xf]
    %v163 = vld [vmem:[#allocation5 + $0x1e0] sm:$0xf]
    %v164 = vld [vmem:[#allocation5 + $0x1e4] sm:$0xf]
    %v165 = vld [vmem:[#allocation5 + $0x1e8] sm:$0xf]
    %v166 = vld [vmem:[#allocation5 + $0x1ec] sm:$0xf]
    %v167 = vld [vmem:[#allocation5 + $0x1f0] sm:$0xf]
    %v168 = vld [vmem:[#allocation5 + $0x1f4] sm:$0xf]
    %v169 = vld [vmem:[#allocation5 + $0x1f8] sm:$0xf]
    %v170 = vld [vmem:[#allocation5 + $0x1fc] sm:$0xf]
    %v171 = vld [vmem:[%s2] sm:$0x1]
    %v173 = vlaneseq
    %v174 = vshrl.u32 %v173, 7
    %v175 = vsub.s32 0, %v174
    %v176 = vrot.slane %v171, %v175
    %v179 = vcombine.high %v42, %v42
    %v181 = vunpack.c.l.s4 1966171168
    %v182 = vunpack.c.0.s8 %v181
    %v183 = vlaneseq
    %v184 = vshrl.u32 %v183, 7
    %v185 = vsub.s32 %v182, %v184
    %v186 = vrot.slane %v42, %v185
    %v188 = vunpack.c.l.s4 1966171168
    %v189 = vunpack.c.0.s8 %v188
    %v190 = vlaneseq
    %v191 = vshrl.u32 %v190, 7
    %v192 = vsub.s32 %v189, %v191
    %v193 = vrot.slane %v179, %v192
    %v194 = vcombine.high %v186, %v186
    %v195 = vcombine.high %v193, %v193
    %v197 = vunpack.c.l.s4 1966171168
    %v198 = vunpack.c.0.s8 %v197
    %v199 = vlaneseq
    %v200 = vshrl.u32 %v199, 7
    %v201 = vsub.s32 %v198, %v200
    %v202 = vrot.slane %v186, %v201
    %v204 = vunpack.c.l.s4 1966171168
    %v205 = vunpack.c.0.s8 %v204
    %v206 = vlaneseq
    %v207 = vshrl.u32 %v206, 7
    %v208 = vsub.s32 %v205, %v207
    %v209 = vrot.slane %v193, %v208
    %v211 = vunpack.c.l.s4 1966171168
    %v212 = vunpack.c.0.s8 %v211
    %v213 = vlaneseq
    %v214 = vshrl.u32 %v213, 7
    %v215 = vsub.s32 %v212, %v214
    %v216 = vrot.slane %v194, %v215
    %v218 = vunpack.c.l.s4 1966171168
    %v219 = vunpack.c.0.s8 %v218
    %v220 = vlaneseq
    %v221 = vshrl.u32 %v220, 7
    %v222 = vsub.s32 %v219, %v221
    %v223 = vrot.slane %v195, %v222
    %v224 = vcombine.high %v202, %v202
    %v225 = vcombine.high %v209, %v209
    %v226 = vcombine.high %v216, %v216
    %v227 = vcombine.high %v223, %v223
    %v364 = vunpack.c.l.b16 %v43
    %v365 = vunpack.c.l.b16 %v44
    %v366 = vunpack.c.l.b16 %v45
    %v367 = vunpack.c.l.b16 %v46
    %v368 = vunpack.c.l.b16 %v47
    %v369 = vunpack.c.l.b16 %v48
    %v370 = vunpack.c.l.b16 %v49
    %v371 = vunpack.c.l.b16 %v50
    %v372 = vunpack.c.l.b16 %v51
    %v373 = vunpack.c.l.b16 %v52
    %v374 = vunpack.c.l.b16 %v53
    %v375 = vunpack.c.l.b16 %v54
    %v376 = vunpack.c.l.b16 %v55
    %v377 = vunpack.c.l.b16 %v56
    %v378 = vunpack.c.l.b16 %v57
    %v379 = vunpack.c.l.b16 %v58
    %v380 = vunpack.c.l.b16 %v59
    %v381 = vunpack.c.l.b16 %v60
    %v382 = vunpack.c.l.b16 %v61
    %v383 = vunpack.c.l.b16 %v62
    %v384 = vunpack.c.l.b16 %v63
    %v385 = vunpack.c.l.b16 %v64
    %v386 = vunpack.c.l.b16 %v65
    %v387 = vunpack.c.l.b16 %v66
    %v388 = vunpack.c.l.b16 %v67
    %v389 = vunpack.c.l.b16 %v68
    %v390 = vunpack.c.l.b16 %v69
    %v391 = vunpack.c.l.b16 %v70
    %v392 = vunpack.c.l.b16 %v71
    %v393 = vunpack.c.l.b16 %v72
    %v394 = vunpack.c.l.b16 %v73
    %v395 = vunpack.c.l.b16 %v74
    %v396 = vunpack.c.l.b16 %v75
    %v397 = vunpack.c.l.b16 %v76
    %v398 = vunpack.c.l.b16 %v77
    %v399 = vunpack.c.l.b16 %v78
    %v400 = vunpack.c.l.b16 %v79
    %v401 = vunpack.c.l.b16 %v80
    %v402 = vunpack.c.l.b16 %v81
    %v403 = vunpack.c.l.b16 %v82
    %v404 = vunpack.c.l.b16 %v83
    %v405 = vunpack.c.l.b16 %v84
    %v406 = vunpack.c.l.b16 %v85
    %v407 = vunpack.c.l.b16 %v86
    %v408 = vunpack.c.l.b16 %v87
    %v409 = vunpack.c.l.b16 %v88
    %v410 = vunpack.c.l.b16 %v89
    %v411 = vunpack.c.l.b16 %v90
    %v412 = vunpack.c.l.b16 %v91
    %v413 = vunpack.c.l.b16 %v92
    %v414 = vunpack.c.l.b16 %v93
    %v415 = vunpack.c.l.b16 %v94
    %v416 = vunpack.c.l.b16 %v95
    %v417 = vunpack.c.l.b16 %v96
    %v418 = vunpack.c.l.b16 %v97
    %v419 = vunpack.c.l.b16 %v98
    %v420 = vunpack.c.l.b16 %v99
    %v421 = vunpack.c.l.b16 %v100
    %v422 = vunpack.c.l.b16 %v101
    %v423 = vunpack.c.l.b16 %v102
    %v424 = vunpack.c.l.b16 %v103
    %v425 = vunpack.c.l.b16 %v104
    %v426 = vunpack.c.l.b16 %v105
    %v427 = vunpack.c.l.b16 %v106
    %v428 = vunpack.c.l.b16 %v107
    %v429 = vunpack.c.l.b16 %v108
    %v430 = vunpack.c.l.b16 %v109
    %v431 = vunpack.c.l.b16 %v110
    %v432 = vunpack.c.l.b16 %v111
    %v433 = vunpack.c.l.b16 %v112
    %v434 = vunpack.c.l.b16 %v113
    %v435 = vunpack.c.l.b16 %v114
    %v436 = vunpack.c.l.b16 %v115
    %v437 = vunpack.c.l.b16 %v116
    %v438 = vunpack.c.l.b16 %v117
    %v439 = vunpack.c.l.b16 %v118
    %v440 = vunpack.c.l.b16 %v119
    %v441 = vunpack.c.l.b16 %v120
    %v442 = vunpack.c.l.b16 %v121
    %v443 = vunpack.c.l.b16 %v122
    %v444 = vunpack.c.l.b16 %v123
    %v445 = vunpack.c.l.b16 %v124
    %v446 = vunpack.c.l.b16 %v125
    %v447 = vunpack.c.l.b16 %v126
    %v448 = vunpack.c.l.b16 %v127
    %v449 = vunpack.c.l.b16 %v128
    %v450 = vunpack.c.l.b16 %v129
    %v451 = vunpack.c.l.b16 %v130
    %v452 = vunpack.c.l.b16 %v131
    %v453 = vunpack.c.l.b16 %v132
    %v454 = vunpack.c.l.b16 %v133
    %v455 = vunpack.c.l.b16 %v134
    %v456 = vunpack.c.l.b16 %v135
    %v457 = vunpack.c.l.b16 %v136
    %v458 = vunpack.c.l.b16 %v137
    %v459 = vunpack.c.l.b16 %v138
    %v460 = vunpack.c.l.b16 %v139
    %v461 = vunpack.c.l.b16 %v140
    %v462 = vunpack.c.l.b16 %v141
    %v463 = vunpack.c.l.b16 %v142
    %v464 = vunpack.c.l.b16 %v143
    %v465 = vunpack.c.l.b16 %v144
    %v466 = vunpack.c.l.b16 %v145
    %v467 = vunpack.c.l.b16 %v146
    %v468 = vunpack.c.l.b16 %v147
    %v469 = vunpack.c.l.b16 %v148
    %v470 = vunpack.c.l.b16 %v149
    %v471 = vunpack.c.l.b16 %v150
    %v472 = vunpack.c.l.b16 %v151
    %v473 = vunpack.c.l.b16 %v152
    %v474 = vunpack.c.l.b16 %v153
    %v475 = vunpack.c.l.b16 %v154
    %v476 = vunpack.c.l.b16 %v155
    %v477 = vunpack.c.l.b16 %v156
    %v478 = vunpack.c.l.b16 %v157
    %v479 = vunpack.c.l.b16 %v158
    %v480 = vunpack.c.l.b16 %v159
    %v481 = vunpack.c.l.b16 %v160
    %v482 = vunpack.c.l.b16 %v161
    %v483 = vunpack.c.l.b16 %v162
    %v484 = vunpack.c.l.b16 %v163
    %v485 = vunpack.c.l.b16 %v164
    %v486 = vunpack.c.l.b16 %v165
    %v487 = vunpack.c.l.b16 %v166
    %v488 = vunpack.c.l.b16 %v167
    %v489 = vunpack.c.l.b16 %v168
    %v490 = vunpack.c.l.b16 %v169
    %v491 = vunpack.c.l.b16 %v170
    %v492 = vpack.c.b16 %v365, %v364
    %v493 = vpack.c.b16 %v367, %v366
    %v494 = vpack.c.b16 %v369, %v368
    %v495 = vpack.c.b16 %v371, %v370
    %v496 = vpack.c.b16 %v373, %v372
    %v497 = vpack.c.b16 %v375, %v374
    %v498 = vpack.c.b16 %v377, %v376
    %v499 = vpack.c.b16 %v379, %v378
    %v500 = vpack.c.b16 %v381, %v380
    %v501 = vpack.c.b16 %v383, %v382
    %v502 = vpack.c.b16 %v385, %v384
    %v503 = vpack.c.b16 %v387, %v386
    %v504 = vpack.c.b16 %v389, %v388
    %v505 = vpack.c.b16 %v391, %v390
    %v506 = vpack.c.b16 %v393, %v392
    %v507 = vpack.c.b16 %v395, %v394
    %v508 = vpack.c.b16 %v397, %v396
    %v509 = vpack.c.b16 %v399, %v398
    %v510 = vpack.c.b16 %v401, %v400
    %v511 = vpack.c.b16 %v403, %v402
    %v512 = vpack.c.b16 %v405, %v404
    %v513 = vpack.c.b16 %v407, %v406
    %v514 = vpack.c.b16 %v409, %v408
    %v515 = vpack.c.b16 %v411, %v410
    %v516 = vpack.c.b16 %v413, %v412
    %v517 = vpack.c.b16 %v415, %v414
    %v518 = vpack.c.b16 %v417, %v416
    %v519 = vpack.c.b16 %v419, %v418
    %v520 = vpack.c.b16 %v421, %v420
    %v521 = vpack.c.b16 %v423, %v422
    %v522 = vpack.c.b16 %v425, %v424
    %v523 = vpack.c.b16 %v427, %v426
    %v524 = vpack.c.b16 %v429, %v428
    %v525 = vpack.c.b16 %v431, %v430
    %v526 = vpack.c.b16 %v433, %v432
    %v527 = vpack.c.b16 %v435, %v434
    %v528 = vpack.c.b16 %v437, %v436
    %v529 = vpack.c.b16 %v439, %v438
    %v530 = vpack.c.b16 %v441, %v440
    %v531 = vpack.c.b16 %v443, %v442
    %v532 = vpack.c.b16 %v445, %v444
    %v533 = vpack.c.b16 %v447, %v446
    %v534 = vpack.c.b16 %v449, %v448
    %v535 = vpack.c.b16 %v451, %v450
    %v536 = vpack.c.b16 %v453, %v452
    %v537 = vpack.c.b16 %v455, %v454
    %v538 = vpack.c.b16 %v457, %v456
    %v539 = vpack.c.b16 %v459, %v458
    %v540 = vpack.c.b16 %v461, %v460
    %v541 = vpack.c.b16 %v463, %v462
    %v542 = vpack.c.b16 %v465, %v464
    %v543 = vpack.c.b16 %v467, %v466
    %v544 = vpack.c.b16 %v469, %v468
    %v545 = vpack.c.b16 %v471, %v470
    %v546 = vpack.c.b16 %v473, %v472
    %v547 = vpack.c.b16 %v475, %v474
    %v548 = vpack.c.b16 %v477, %v476
    %v549 = vpack.c.b16 %v479, %v478
    %v550 = vpack.c.b16 %v481, %v480
    %v551 = vpack.c.b16 %v483, %v482
    %v552 = vpack.c.b16 %v485, %v484
    %v553 = vpack.c.b16 %v487, %v486
    %v554 = vpack.c.b16 %v489, %v488
    %v555 = vpack.c.b16 %v491, %v490
    %620 = vmatprep.subr.bf16.mxu0 0
    %621 = vmatpush1.bf16.msra.mxu0 %v492
    %622 = vmatprep.subr.bf16.mxu0 0
    %623 = vmatpush1.bf16.msra.mxu0 %v493
    %624 = vmatprep.subr.bf16.mxu0 0
    %625 = vmatpush1.bf16.msra.mxu0 %v494
    %626 = vmatprep.subr.bf16.mxu0 0
    %627 = vmatpush1.bf16.msra.mxu0 %v495
    %628 = vmatprep.subr.bf16.mxu0 0
    %629 = vmatpush1.bf16.msra.mxu0 %v496
    %630 = vmatprep.subr.bf16.mxu0 0
    %631 = vmatpush1.bf16.msra.mxu0 %v497
    %632 = vmatprep.subr.bf16.mxu0 0
    %633 = vmatpush1.bf16.msra.mxu0 %v498
    %634 = vmatprep.subr.bf16.mxu0 0
    %635 = vmatpush1.bf16.msra.mxu0 %v499
    %636 = vmatprep.subr.bf16.mxu0 0
    %637 = vmatpush1.bf16.msra.mxu0 %v500
    %638 = vmatprep.subr.bf16.mxu0 0
    %639 = vmatpush1.bf16.msra.mxu0 %v501
    %640 = vmatprep.subr.bf16.mxu0 0
    %641 = vmatpush1.bf16.msra.mxu0 %v502
    %642 = vmatprep.subr.bf16.mxu0 0
    %643 = vmatpush1.bf16.msra.mxu0 %v503
    %644 = vmatprep.subr.bf16.mxu0 0
    %645 = vmatpush1.bf16.msra.mxu0 %v504
    %646 = vmatprep.subr.bf16.mxu0 0
    %647 = vmatpush1.bf16.msra.mxu0 %v505
    %648 = vmatprep.subr.bf16.mxu0 0
    %649 = vmatpush1.bf16.msra.mxu0 %v506
    %650 = vmatprep.subr.bf16.mxu0 0
    %651 = vmatpush1.bf16.msra.mxu0 %v507
    %652 = vmatprep.mubr.bf16.mxu0 %v216
    %653 = vmatmul.mubr.bf16.gmra.mrb[0].mxu0 %v202
    %v654 = vpop.f32.mrb[0].mxu0
    %v655 = vadd.f32 %v176, %v654
    %v656 = vpop.f32.mrb[0].mxu0
    %v657 = vpop.f32.mrb[0].mxu0
    %v658 = vpop.f32.mrb[0].mxu0
    %659 = vdwg.mxu0
    %660 = vmatprep.subr.bf16.mxu0 0
    %661 = vmatpush1.bf16.msra.mxu0 %v508
    %662 = vmatprep.subr.bf16.mxu0 0
    %663 = vmatpush1.bf16.msra.mxu0 %v509
    %664 = vmatprep.subr.bf16.mxu0 0
    %665 = vmatpush1.bf16.msra.mxu0 %v510
    %666 = vmatprep.subr.bf16.mxu0 0
    %667 = vmatpush1.bf16.msra.mxu0 %v511
    %668 = vmatprep.subr.bf16.mxu0 0
    %669 = vmatpush1.bf16.msra.mxu0 %v512
    %670 = vmatprep.subr.bf16.mxu0 0
    %671 = vmatpush1.bf16.msra.mxu0 %v513
    %672 = vmatprep.subr.bf16.mxu0 0
    %673 = vmatpush1.bf16.msra.mxu0 %v514
    %674 = vmatprep.subr.bf16.mxu0 0
    %675 = vmatpush1.bf16.msra.mxu0 %v515
    %676 = vmatprep.subr.bf16.mxu0 0
    %677 = vmatpush1.bf16.msra.mxu0 %v516
    %678 = vmatprep.subr.bf16.mxu0 0
    %679 = vmatpush1.bf16.msra.mxu0 %v517
    %680 = vmatprep.subr.bf16.mxu0 0
    %681 = vmatpush1.bf16.msra.mxu0 %v518
    %682 = vmatprep.subr.bf16.mxu0 0
    %683 = vmatpush1.bf16.msra.mxu0 %v519
    %684 = vmatprep.subr.bf16.mxu0 0
    %685 = vmatpush1.bf16.msra.mxu0 %v520
    %686 = vmatprep.subr.bf16.mxu0 0
    %687 = vmatpush1.bf16.msra.mxu0 %v521
    %688 = vmatprep.subr.bf16.mxu0 0
    %689 = vmatpush1.bf16.msra.mxu0 %v522
    %690 = vmatprep.subr.bf16.mxu0 0
    %691 = vmatpush1.bf16.msra.mxu0 %v523
    %692 = vmatprep.mubr.bf16.mxu0 %v226
    %693 = vmatmul.mubr.bf16.gmra.mrb[0].mxu0 %v224
    %v694 = vpop.f32.mrb[0].mxu0
    %v695 = vadd.f32 %v655, %v694
    %v696 = vpop.f32.mrb[0].mxu0
    %v697 = vpop.f32.mrb[0].mxu0
    %v698 = vpop.f32.mrb[0].mxu0
    %699 = vdwg.mxu0
    %700 = vmatprep.subr.bf16.mxu0 0
    %701 = vmatpush1.bf16.msra.mxu0 %v524
    %702 = vmatprep.subr.bf16.mxu0 0
    %703 = vmatpush1.bf16.msra.mxu0 %v525
    %704 = vmatprep.subr.bf16.mxu0 0
    %705 = vmatpush1.bf16.msra.mxu0 %v526
    %706 = vmatprep.subr.bf16.mxu0 0
    %707 = vmatpush1.bf16.msra.mxu0 %v527
    %708 = vmatprep.subr.bf16.mxu0 0
    %709 = vmatpush1.bf16.msra.mxu0 %v528
    %710 = vmatprep.subr.bf16.mxu0 0
    %711 = vmatpush1.bf16.msra.mxu0 %v529
    %712 = vmatprep.subr.bf16.mxu0 0
    %713 = vmatpush1.bf16.msra.mxu0 %v530
    %714 = vmatprep.subr.bf16.mxu0 0
    %715 = vmatpush1.bf16.msra.mxu0 %v531
    %716 = vmatprep.subr.bf16.mxu0 0
    %717 = vmatpush1.bf16.msra.mxu0 %v532
    %718 = vmatprep.subr.bf16.mxu0 0
    %719 = vmatpush1.bf16.msra.mxu0 %v533
    %720 = vmatprep.subr.bf16.mxu0 0
    %721 = vmatpush1.bf16.msra.mxu0 %v534
    %722 = vmatprep.subr.bf16.mxu0 0
    %723 = vmatpush1.bf16.msra.mxu0 %v535
    %724 = vmatprep.subr.bf16.mxu0 0
    %725 = vmatpush1.bf16.msra.mxu0 %v536
    %726 = vmatprep.subr.bf16.mxu0 0
    %727 = vmatpush1.bf16.msra.mxu0 %v537
    %728 = vmatprep.subr.bf16.mxu0 0
    %729 = vmatpush1.bf16.msra.mxu0 %v538
    %730 = vmatprep.subr.bf16.mxu0 0
    %731 = vmatpush1.bf16.msra.mxu0 %v539
    %732 = vmatprep.mubr.bf16.mxu0 %v223
    %733 = vmatmul.mubr.bf16.gmra.mrb[0].mxu0 %v209
    %v734 = vpop.f32.mrb[0].mxu0
    %v735 = vadd.f32 %v695, %v734
    %v736 = vpop.f32.mrb[0].mxu0
    %v737 = vpop.f32.mrb[0].mxu0
    %v738 = vpop.f32.mrb[0].mxu0
    %739 = vdwg.mxu0
    %740 = vmatprep.subr.bf16.mxu0 0
    %741 = vmatpush1.bf16.msra.mxu0 %v540
    %742 = vmatprep.subr.bf16.mxu0 0
    %743 = vmatpush1.bf16.msra.mxu0 %v541
    %744 = vmatprep.subr.bf16.mxu0 0
    %745 = vmatpush1.bf16.msra.mxu0 %v542
    %746 = vmatprep.subr.bf16.mxu0 0
    %747 = vmatpush1.bf16.msra.mxu0 %v543
    %748 = vmatprep.subr.bf16.mxu0 0
    %749 = vmatpush1.bf16.msra.mxu0 %v544
    %750 = vmatprep.subr.bf16.mxu0 0
    %751 = vmatpush1.bf16.msra.mxu0 %v545
    %752 = vmatprep.subr.bf16.mxu0 0
    %753 = vmatpush1.bf16.msra.mxu0 %v546
    %754 = vmatprep.subr.bf16.mxu0 0
    %755 = vmatpush1.bf16.msra.mxu0 %v547
    %756 = vmatprep.subr.bf16.mxu0 0
    %757 = vmatpush1.bf16.msra.mxu0 %v548
    %758 = vmatprep.subr.bf16.mxu0 0
    %759 = vmatpush1.bf16.msra.mxu0 %v549
    %760 = vmatprep.subr.bf16.mxu0 0
    %761 = vmatpush1.bf16.msra.mxu0 %v550
    %762 = vmatprep.subr.bf16.mxu0 0
    %763 = vmatpush1.bf16.msra.mxu0 %v551
    %764 = vmatprep.subr.bf16.mxu0 0
    %765 = vmatpush1.bf16.msra.mxu0 %v552
    %766 = vmatprep.subr.bf16.mxu0 0
    %767 = vmatpush1.bf16.msra.mxu0 %v553
    %768 = vmatprep.subr.bf16.mxu0 0
    %769 = vmatpush1.bf16.msra.mxu0 %v554
    %770 = vmatprep.subr.bf16.mxu0 0
    %771 = vmatpush1.bf16.msra.mxu0 %v555
    %772 = vmatprep.mubr.bf16.mxu0 %v227
    %773 = vmatmul.mubr.bf16.gmra.mrb[0].mxu0 %v225
    %v774 = vpop.f32.mrb[0].mxu0
    %v775 = vadd.f32 %v735, %v774
    %v776 = vpop.f32.mrb[0].mxu0
    %v777 = vpop.f32.mrb[0].mxu0
    %v778 = vpop.f32.mrb[0].mxu0
    %779 = vdwg.mxu0
    %780 = vst [vmem:[#allocation7] sm:$0x3] %v775
    // Predicated region
    $region22: #{tpu_custom_call.1} parent=1 // pred_check
      _
    $region23: #{tpu_custom_call.1} parent=1 // pred_check_branch
      %782 = sbr.rel (0) target = $region25
    $region24: #{tpu_custom_call.1} parent=1 // pred_region
      %s784 = ssub.s32 32, 32
      %785 = vsyncadd [#allocation4], %s784
      %s787 = sshll.u32 [#allocation7], 4
      %s788 = int_to_ptr.vmem [resolvable:$true] %s787
      %790 = dma.vmem_to_hbm [thread:$0]  %s788, 32, %s3, [#allocation4]
    $region25: #{tpu_custom_call.1} parent=1 // pred_fallthru
      _
    // Predicated region
    $region26: #{tpu_custom_call.1} parent=1 // pred_check
      _
    $region27: #{tpu_custom_call.1} parent=1 // pred_check_branch
      %792 = sbr.rel (0) target = $region29
    $region28: #{tpu_custom_call.1} parent=1 // pred_region
      %793 = dma.done [#allocation4], 32
    $region29: #{tpu_custom_call.1} parent=1 // pred_fallthru
      _
    %794 = vsyncpa [#allocation3], 1
    %795 = vsyncpa [#allocation6], 1
    %796 = vsyncpa [#allocation4], 1

</llo_original>
